<compile_context>
chip_gen: v6e
topology: v6e:2x2x1
jax: 0.10.0
libtpu: 0.0.40
codegen_flags: <defaults>
</compile_context>

<pallas_src>
import functools

import jax
import jax.numpy as jnp
from jax import lax
from jax.experimental import pallas as pl
from jax.experimental.pallas import tpu as pltpu


# --------------------------------------------------------------------------
# Single-pass kernel: grid = (B,), whole (C, HW) slab per batch in VMEM.
# --------------------------------------------------------------------------
def _cgaf_single_pass_kernel(x0_ref, x1_ref, w_ref, bnb_ref, fc1_ref, fc2_ref,
                             out_ref, *, c1, inv_hw, split_store):
    """x0_ref:(C0,HW) x1_ref:(C1,HW) w_ref:(C1,C0) bnb_ref:(C1,1)
    fc1_ref:(hidden,2C1) fc2_ref:(2C1,hidden) out_ref:(2C1,HW)."""
    x0 = x0_ref[...]                               # native dtype (MXU operand)
    x1 = x1_ref[...].astype(jnp.float32)           # (C1, HW) f32 for VPU math

    # adjust_conv: 1x1 conv (BN scale folded into the weight) + bias + SiLU.
    z = jnp.dot(w_ref[...], x0, preferred_element_type=jnp.float32)
    z = z + bnb_ref[...]
    y0 = z * jax.nn.sigmoid(z)                     # (C1, HW) f32

    # SE: global average pool of [y0 ; x1] -> fc1 -> relu -> fc2 -> sigmoid.
    s0 = jnp.sum(y0, axis=1, keepdims=True) * inv_hw
    s1 = jnp.sum(x1, axis=1, keepdims=True) * inv_hw
    pooled = jnp.concatenate([s0, s1], axis=0)     # (2C1, 1)
    h = jnp.maximum(
        jnp.dot(fc1_ref[...], pooled, preferred_element_type=jnp.float32), 0.0)
    gate = jax.nn.sigmoid(
        jnp.dot(fc2_ref[...], h, preferred_element_type=jnp.float32))
    a0 = gate[:c1, :]                              # gate for the y0 half
    a1 = gate[c1:, :]                              # gate for the x1 half

    # out[:C1] = y0 + x1*(x1*a1) ; out[C1:] = x1 + y0*(y0*a0)
    top = (y0 + (x1 * x1) * a1).astype(out_ref.dtype)
    bot = (x1 + (y0 * y0) * a0).astype(out_ref.dtype)
    if split_store:
        out_ref[:c1, :] = top
        out_ref[c1:, :] = bot
    else:
        out_ref[...] = jnp.concatenate([top, bot], axis=0)


# --------------------------------------------------------------------------
# Two-phase fallback kernel: grid = (B, 2, n_spatial_tiles).
#   phase 0: accumulate the SE pool across tiles; on the last tile -> gate.
#   phase 1: recompute y0 per tile and write both output halves.
# --------------------------------------------------------------------------
def _cgaf_two_phase_kernel(x0_ref, x1_ref, w_ref, bnb_ref, fc1_ref, fc2_ref,
                           out_ref, se_ref, *, c1, hw_true, tile, last_ragged,
                           inv_hw, split_store):
    phase = pl.program_id(1)
    t = pl.program_id(2)
    n_t = pl.num_programs(2)

    x0 = x0_ref[...]                               # (C0, T) native dtype
    x1 = x1_ref[...].astype(jnp.float32)           # (C1, T) f32

    z = jnp.dot(w_ref[...], x0, preferred_element_type=jnp.float32)
    z = z + bnb_ref[...]
    y0 = z * jax.nn.sigmoid(z)                     # (C1, T) f32

    @pl.when(phase == 0)
    def _pool():
        @pl.when(t == 0)
        def _init():
            se_ref[...] = jnp.zeros_like(se_ref)
            # Phase 0 keeps output block (b,0,0) resident; keep it defined so
            # any writeback policy only ever flushes initialised data.
            out_ref[...] = jnp.zeros_like(out_ref)

        def _accum(y0v, x1v):
            s0 = jnp.sum(y0v, axis=1, keepdims=True)
            s1 = jnp.sum(x1v, axis=1, keepdims=True)
            se_ref[...] = se_ref[...] + jnp.concatenate([s0, s1], axis=0)

        if last_ragged:
            # Only the last tile has out-of-bounds lanes; mask there only.
            @pl.when(t == n_t - 1)
            def _masked():
                lane = lax.broadcasted_iota(jnp.int32, (1, tile), 1) + t * tile
                valid = lane < hw_true
                _accum(jnp.where(valid, y0, 0.0), jnp.where(valid, x1, 0.0))

            @pl.when(t != n_t - 1)
            def _unmasked():
                _accum(y0, x1)
        else:
            _accum(y0, x1)

        @pl.when(t == n_t - 1)
        def _gate():
            pooled = se_ref[...] * inv_hw          # (2C1, 1)
            h = jnp.maximum(
                jnp.dot(fc1_ref[...], pooled,
                        preferred_element_type=jnp.float32), 0.0)
            se_ref[...] = jax.nn.sigmoid(
                jnp.dot(fc2_ref[...], h, preferred_element_type=jnp.float32))

    @pl.when(phase == 1)
    def _apply():
        gate = se_ref[...]
        a0 = gate[:c1, :]
        a1 = gate[c1:, :]
        top = (y0 + (x1 * x1) * a1).astype(out_ref.dtype)
        bot = (x1 + (y0 * y0) * a0).astype(out_ref.dtype)
        if split_store:
            out_ref[:c1, :] = top
            out_ref[c1:, :] = bot
        else:
            out_ref[...] = jnp.concatenate([top, bot], axis=0)


# --------------------------------------------------------------------------
# Wrapper
# --------------------------------------------------------------------------
def cgaf_forward(x0, x1, w_adj, bn_scale, bn_bias, fc1_w, fc2_w, *,
                 tile_hw=None, out_dtype=None, force_two_phase=False):
    """x0: (B, C0, H, W), x1: (B, C1, H, W)  ->  (B, 2*C1, H, W)."""
    B, C0, H, W = x0.shape
    C1 = x1.shape[1]
    hidden = fc1_w.shape[0]
    HW = H * W
    if out_dtype is None:
        out_dtype = x1.dtype

    x0f = x0.reshape(B, C0, HW)
    x1f = x1.reshape(B, C1, HW)

    in_dtype = x0.dtype
    in_b = jnp.dtype(in_dtype).itemsize
    x1_b = jnp.dtype(x1.dtype).itemsize
    out_b = jnp.dtype(out_dtype).itemsize

    # Fold the BN scale into the 1x1 conv weight; keep it in the input dtype
    # so the MXU runs its native (bf16) path with no per-tile upcast of x0.
    w_scaled = (bn_scale.astype(jnp.float32)[:, None]
                * w_adj.astype(jnp.float32)).astype(in_dtype)
    bnb = bn_bias.reshape(C1, 1).astype(jnp.float32)
    fc1 = fc1_w.astype(jnp.float32)
    fc2 = fc2_w.astype(jnp.float32)

    # Split half-block stores are only safe when C1 is a multiple of the
    # packed sublane tile (8 for f32, 16 for bf16).
    split_store = (C1 % (8 * max(1, 4 // out_b)) == 0)

    inv_hw = 1.0 / float(HW)
    MIB = 1024 * 1024

    # Rough per-lane VMEM cost of the single-pass slab (double-buffered I/O
    # plus a conservative f32 working set).
    per_lane = (2 * (C0 * in_b + C1 * x1_b) + 2 * (2 * C1) * out_b
                + (C0 + 6 * C1) * 4)
    est_single = HW * per_lane
    use_single = (not force_two_phase) and est_single <= 36 * MIB

    if use_single:
        kernel = functools.partial(_cgaf_single_pass_kernel, c1=C1,
                                   inv_hw=inv_hw, split_store=split_store)
        vmem_lim = int(min(max(est_single * 1.3, 24 * MIB), 56 * MIB))
        out = pl.pallas_call(
            kernel,
            out_shape=jax.ShapeDtypeStruct((B, 2 * C1, HW), out_dtype),
            grid_spec=pltpu.PrefetchScalarGridSpec(
                num_scalar_prefetch=0,
                grid=(B,),
                in_specs=[
                    pl.BlockSpec((None, C0, HW), lambda b: (b, 0, 0)),
                    pl.BlockSpec((None, C1, HW), lambda b: (b, 0, 0)),
                    pl.BlockSpec((C1, C0), lambda b: (0, 0)),
                    pl.BlockSpec((C1, 1), lambda b: (0, 0)),
                    pl.BlockSpec((hidden, 2 * C1), lambda b: (0, 0)),
                    pl.BlockSpec((2 * C1, hidden), lambda b: (0, 0)),
                ],
                out_specs=pl.BlockSpec((None, 2 * C1, HW), lambda b: (b, 0, 0)),
            ),
            compiler_params=pltpu.CompilerParams(
                dimension_semantics=("parallel",),
                vmem_limit_bytes=vmem_lim),
        )(x0f, x1f, w_scaled, bnb, fc1, fc2)
        return out.reshape(B, 2 * C1, H, W)

    # ---------------- two-phase fallback (large H*W) ----------------------
    if tile_hw is None:
        tile_hw = int((12 * MIB) // max(per_lane, 1))
        tile_hw = max(512, min(tile_hw, 8192))
    tile = max(128, (min(tile_hw, HW + 127) // 128) * 128)
    n_t = pl.cdiv(HW, tile)
    last_ragged = (HW % tile) != 0

    kernel = functools.partial(
        _cgaf_two_phase_kernel, c1=C1, hw_true=HW, tile=tile,
        last_ragged=last_ragged, inv_hw=inv_hw, split_store=split_store)
    vmem_lim = int(min(max(tile * per_lane * 1.3, 16 * MIB), 56 * MIB))

    out = pl.pallas_call(
        kernel,
        out_shape=jax.ShapeDtypeStruct((B, 2 * C1, HW), out_dtype),
        grid_spec=pltpu.PrefetchScalarGridSpec(
            num_scalar_prefetch=0,
            grid=(B, 2, n_t),                      # (batch, phase, spatial)
            in_specs=[
                pl.BlockSpec((None, C0, tile), lambda b, p, t: (b, 0, t)),
                pl.BlockSpec((None, C1, tile), lambda b, p, t: (b, 0, t)),
                pl.BlockSpec((C1, C0), lambda b, p, t: (0, 0)),
                pl.BlockSpec((C1, 1), lambda b, p, t: (0, 0)),
                pl.BlockSpec((hidden, 2 * C1), lambda b, p, t: (0, 0)),
                pl.BlockSpec((2 * C1, hidden), lambda b, p, t: (0, 0)),
            ],
            # Phase 0 pins the output to block (b,0,0) (zero-initialised,
            # never flushed mid-phase); phase 1 writes block (b,0,t) tile by
            # tile with lane-dense stores.
            out_specs=pl.BlockSpec((None, 2 * C1, tile),
                                   lambda b, p, t: (b, 0, p * t)),
            scratch_shapes=[pltpu.VMEM((2 * C1, 1), jnp.float32)],
        ),
        compiler_params=pltpu.CompilerParams(
            dimension_semantics=("parallel", "arbitrary", "arbitrary"),
            vmem_limit_bytes=vmem_lim),
    )(x0f, x1f, w_scaled, bnb, fc1, fc2)
    return out.reshape(B, 2 * C1, H, W)


# --------------------------------------------------------------------------
# Pure-JAX reference (mirrors the PyTorch forward, eval-mode BN)
# --------------------------------------------------------------------------
def cgaf_reference(x0, x1, w_adj, bn_scale, bn_bias, fc1_w, fc2_w):
    C1 = x1.shape[1]
    x0 = x0.astype(jnp.float32)
    x1 = x1.astype(jnp.float32)
    z = jnp.einsum('oc,bchw->bohw', w_adj, x0)
    z = z * bn_scale.reshape(1, C1, 1, 1) + bn_bias.reshape(1, C1, 1, 1)
    y0 = z * jax.nn.sigmoid(z)
    xc = jnp.concatenate([y0, x1], axis=1)
    pooled = xc.mean(axis=(2, 3))                       # (B, 2*C1)
    h = jnp.maximum(pooled @ fc1_w.T, 0.0)
    attn = jax.nn.sigmoid(h @ fc2_w.T)[:, :, None, None]
    a0, a1 = attn[:, :C1], attn[:, C1:]
    out0 = y0 + (x1 * x1) * a1
    out1 = x1 + (y0 * y0) * a0
    return jnp.concatenate([out0, out1], axis=1)


if __name__ == "__main__":
    # inc = [32, 16] -> adjust_conv is 1x1 Conv(32 -> 16) + BN + SiLU,
    # SEAttention channel = 32, reduction = 16 -> hidden = 2.
    B, C0, C1 = 2, 32, 16
    hidden = max(1, (2 * C1) // 16)

    key = jax.random.PRNGKey(0)
    k0, k1, k2, k3, k4, k5, k6, k7, k8 = jax.random.split(key, 9)

    H = W = 16
    x0 = jax.random.normal(k0, (B, C0, H, W), dtype=jnp.float32)
    x1 = jax.random.normal(k1, (B, C1, H, W), dtype=jnp.float32)

    w_adj = jax.random.normal(k2, (C1, C0), dtype=jnp.float32) * 0.1
    # Non-trivial (eval-mode) BatchNorm2d stats to exercise the folding.
    eps = 1e-5
    gamma = 1.0 + 0.1 * jax.random.normal(k5, (C1,), dtype=jnp.float32)
    beta = 0.1 * jax.random.normal(k6, (C1,), dtype=jnp.float32)
    run_mean = 0.05 * jax.random.normal(k7, (C1,), dtype=jnp.float32)
    run_var = 1.0 + 0.1 * jax.random.uniform(k8, (C1,), dtype=jnp.float32)
    bn_scale = gamma / jnp.sqrt(run_var + eps)
    bn_bias = beta - run_mean * bn_scale
    fc1_w = jax.random.normal(k3, (hidden, 2 * C1), dtype=jnp.float32) * 0.05
    fc2_w = jax.random.normal(k4, (2 * C1, hidden), dtype=jnp.float32) * 0.05

    # --- check 1: single-pass fast path, f32 I/O ---------------------------
    out = jax.block_until_ready(
        cgaf_forward(x0, x1, w_adj, bn_scale, bn_bias, fc1_w, fc2_w))
    ref = cgaf_reference(x0, x1, w_adj, bn_scale, bn_bias, fc1_w, fc2_w)
    assert out.shape == (B, 2 * C1, H, W), out.shape
    assert jnp.allclose(out, ref, rtol=1e-4, atol=1e-4), \
        float(jnp.max(jnp.abs(out - ref)))

    # --- check 2: ragged spatial size (15x15), still single pass -----------
    H2 = W2 = 15
    x0b = jax.random.normal(k0, (B, C0, H2, W2), dtype=jnp.float32)
    x1b = jax.random.normal(k1, (B, C1, H2, W2), dtype=jnp.float32)
    out2 = jax.block_until_ready(
        cgaf_forward(x0b, x1b, w_adj, bn_scale, bn_bias, fc1_w, fc2_w))
    ref2 = cgaf_reference(x0b, x1b, w_adj, bn_scale, bn_bias, fc1_w, fc2_w)
    assert out2.shape == (B, 2 * C1, H2, W2), out2.shape
    assert jnp.allclose(out2, ref2, rtol=1e-4, atol=1e-4), \
        float(jnp.max(jnp.abs(out2 - ref2)))

    # --- check 3: bf16 HBM I/O (half the DMA bytes; f32 in-kernel math) ----
    x0_bf = x0.astype(jnp.bfloat16)
    x1_bf = x1.astype(jnp.bfloat16)
    out3 = jax.block_until_ready(
        cgaf_forward(x0_bf, x1_bf, w_adj, bn_scale, bn_bias, fc1_w, fc2_w))
    ref3 = cgaf_reference(x0_bf.astype(jnp.float32), x1_bf.astype(jnp.float32),
                          w_adj, bn_scale, bn_bias, fc1_w, fc2_w)
    assert out3.dtype == jnp.bfloat16
    assert jnp.allclose(out3.astype(jnp.float32), ref3, rtol=2e-2, atol=2e-2), \
        float(jnp.max(jnp.abs(out3.astype(jnp.float32) - ref3)))

    # --- check 4: forced two-phase fallback (ragged, 2 spatial tiles) ------
    out4 = jax.block_until_ready(
        cgaf_forward(x0b, x1b, w_adj, bn_scale, bn_bias, fc1_w, fc2_w,
                     tile_hw=128, force_two_phase=True))
    assert out4.shape == (B, 2 * C1, H2, W2), out4.shape
    assert jnp.allclose(out4, ref2, rtol=1e-4, atol=1e-4), \
        float(jnp.max(jnp.abs(out4 - ref2)))

    print("KERNEL_OK")
</pallas_src>

<mosaic_0001>
module attributes {stable_mosaic.version = 11 : i64} {
  func.func @_cgaf_single_pass_kernel(%arg0: i32, %arg1: memref<1x32x256xf32, #tpu.memory_space<vmem>>, %arg2: memref<1x16x256xf32, #tpu.memory_space<vmem>>, %arg3: memref<16x32xf32, #tpu.memory_space<vmem>>, %arg4: memref<16x1xf32, #tpu.memory_space<vmem>>, %arg5: memref<2x32xf32, #tpu.memory_space<vmem>>, %arg6: memref<32x2xf32, #tpu.memory_space<vmem>>, %arg7: memref<1x32x256xf32, #tpu.memory_space<vmem>>) attributes {dimension_semantics = [#tpu.dimension_semantics<parallel>], iteration_bounds = array<i64: 2>, scalar_prefetch = 0 : i64, scratch_operands = 0 : i64, tpu.core_type = #tpu.core_type<tc>, window_params = [{transform_indices = @transform_0, window_bounds = array<i64: 1, 32, 256>}, {transform_indices = @transform_1, window_bounds = array<i64: 1, 16, 256>}, {pipeline_mode = #tpu.pipeline_mode<synchronous>, transform_indices = @transform_2, window_bounds = array<i64: 16, 32>}, {pipeline_mode = #tpu.pipeline_mode<synchronous>, transform_indices = @transform_3, window_bounds = array<i64: 16, 1>}, {pipeline_mode = #tpu.pipeline_mode<synchronous>, transform_indices = @transform_4, window_bounds = array<i64: 2, 32>}, {pipeline_mode = #tpu.pipeline_mode<synchronous>, transform_indices = @transform_5, window_bounds = array<i64: 32, 2>}, {transform_indices = @transform_6, window_bounds = array<i64: 1, 32, 256>}]} {
    %c0 = arith.constant 0 : index
    %c0_0 = arith.constant 0 : index
    %c0_1 = arith.constant 0 : index
    %0 = vector.load %arg1[%c0, %c0_0, %c0_1] : memref<1x32x256xf32, #tpu.memory_space<vmem>>, vector<1x32x256xf32>
    %1 = vector.shape_cast %0 : vector<1x32x256xf32> to vector<32x256xf32>
    %c0_2 = arith.constant 0 : index
    %c0_3 = arith.constant 0 : index
    %c0_4 = arith.constant 0 : index
    %2 = vector.load %arg2[%c0_2, %c0_3, %c0_4] : memref<1x16x256xf32, #tpu.memory_space<vmem>>, vector<1x16x256xf32>
    %3 = vector.shape_cast %2 : vector<1x16x256xf32> to vector<16x256xf32>
    %c0_5 = arith.constant 0 : index
    %c0_6 = arith.constant 0 : index
    %4 = vector.load %arg3[%c0_5, %c0_6] : memref<16x32xf32, #tpu.memory_space<vmem>>, vector<16x32xf32>
    %cst = arith.constant dense<0.000000e+00> : vector<16x256xf32>
    %5 = tpu.matmul %4, %1, %cst {dimension_numbers = #tpu.dot_dimension_numbers<[1], [0], [0], [1], [0, 0, 1, 1], [], []>} : vector<16x32xf32>, vector<32x256xf32>, vector<16x256xf32> -> vector<16x256xf32>
    %c0_7 = arith.constant 0 : index
    %c0_8 = arith.constant 0 : index
    %6 = vector.load %arg4[%c0_7, %c0_8] : memref<16x1xf32, #tpu.memory_space<vmem>>, vector<16x1xf32>
    %7 = vector.broadcast %6 : vector<16x1xf32> to vector<16x256xf32>
    %8 = arith.addf %5, %7 : vector<16x256xf32>
    %9 = arith.negf %8 : vector<16x256xf32>
    %10 = math.exp %9 : vector<16x256xf32>
    %cst_9 = arith.constant 1.000000e+00 : f32
    %11 = vector.broadcast %cst_9 : f32 to vector<16x256xf32>
    %12 = arith.addf %11, %10 : vector<16x256xf32>
    %13 = arith.divf %11, %12 : vector<16x256xf32>
    %14 = arith.mulf %8, %13 : vector<16x256xf32>
    %cst_10 = arith.constant dense<0.000000e+00> : vector<16xf32>
    %15 = vector.multi_reduction <add>, %14, %cst_10 [1] : vector<16x256xf32> to vector<16xf32>
    %16 = vector.shape_cast %15 : vector<16xf32> to vector<16x1xf32>
    %cst_11 = arith.constant 3.906250e-03 : f32
    %17 = vector.broadcast %cst_11 : f32 to vector<16x1xf32>
    %18 = arith.mulf %16, %17 : vector<16x1xf32>
    %cst_12 = arith.constant dense<0.000000e+00> : vector<16xf32>
    %19 = vector.multi_reduction <add>, %3, %cst_12 [1] : vector<16x256xf32> to vector<16xf32>
    %20 = vector.shape_cast %19 : vector<16xf32> to vector<16x1xf32>
    %cst_13 = arith.constant 3.906250e-03 : f32
    %21 = vector.broadcast %cst_13 : f32 to vector<16x1xf32>
    %22 = arith.mulf %20, %21 : vector<16x1xf32>
    %23 = tpu.concatenate %18, %22 in 0 : vector<16x1xf32>, vector<16x1xf32> -> vector<32x1xf32>
    %c0_14 = arith.constant 0 : index
    %c0_15 = arith.constant 0 : index
    %24 = vector.load %arg5[%c0_14, %c0_15] : memref<2x32xf32, #tpu.memory_space<vmem>>, vector<2x32xf32>
    %cst_16 = arith.constant dense<0.000000e+00> : vector<2x1xf32>
    %25 = tpu.matmul %24, %23, %cst_16 {dimension_numbers = #tpu.dot_dimension_numbers<[1], [0], [0], [1], [0, 0, 1, 1], [], []>} : vector<2x32xf32>, vector<32x1xf32>, vector<2x1xf32> -> vector<2x1xf32>
    %cst_17 = arith.constant 0.000000e+00 : f32
    %26 = vector.broadcast %cst_17 : f32 to vector<2x1xf32>
    %27 = arith.maximumf %25, %26 : vector<2x1xf32>
    %c0_18 = arith.constant 0 : index
    %c0_19 = arith.constant 0 : index
    %28 = vector.load %arg6[%c0_18, %c0_19] : memref<32x2xf32, #tpu.memory_space<vmem>>, vector<32x2xf32>
    %cst_20 = arith.constant dense<0.000000e+00> : vector<32x1xf32>
    %29 = tpu.matmul %28, %27, %cst_20 {dimension_numbers = #tpu.dot_dimension_numbers<[1], [0], [0], [1], [0, 0, 1, 1], [], []>} : vector<32x2xf32>, vector<2x1xf32>, vector<32x1xf32> -> vector<32x1xf32>
    %30 = arith.negf %29 : vector<32x1xf32>
    %31 = math.exp %30 : vector<32x1xf32>
    %cst_21 = arith.constant 1.000000e+00 : f32
    %32 = vector.broadcast %cst_21 : f32 to vector<32x1xf32>
    %33 = arith.addf %32, %31 : vector<32x1xf32>
    %34 = arith.divf %32, %33 : vector<32x1xf32>
    %35 = vector.extract_strided_slice %34 {offsets = [0, 0], sizes = [16, 1], strides = [1, 1]} : vector<32x1xf32> to vector<16x1xf32>
    %36 = vector.extract_strided_slice %34 {offsets = [16, 0], sizes = [16, 1], strides = [1, 1]} : vector<32x1xf32> to vector<16x1xf32>
    %37 = arith.mulf %3, %3 : vector<16x256xf32>
    %38 = vector.broadcast %36 : vector<16x1xf32> to vector<16x256xf32>
    %39 = arith.mulf %37, %38 : vector<16x256xf32>
    %40 = arith.addf %14, %39 : vector<16x256xf32>
    %41 = arith.mulf %14, %14 : vector<16x256xf32>
    %42 = vector.broadcast %35 : vector<16x1xf32> to vector<16x256xf32>
    %43 = arith.mulf %41, %42 : vector<16x256xf32>
    %44 = arith.addf %3, %43 : vector<16x256xf32>
    %c0_22 = arith.constant 0 : index
    %c0_23 = arith.constant 0 : index
    %c0_24 = arith.constant 0 : index
    %45 = vector.load %arg7[%c0_22, %c0_23, %c0_24] : memref<1x32x256xf32, #tpu.memory_space<vmem>>, vector<1x16x256xf32>
    %46 = vector.shape_cast %45 : vector<1x16x256xf32> to vector<16x256xf32>
    %47 = vector.shape_cast %40 : vector<16x256xf32> to vector<1x16x256xf32>
    tpu.vector_store %arg7[%c0_22, %c0_23, %c0_24], %47 {strides = array<i32>} : memref<1x32x256xf32, #tpu.memory_space<vmem>>, vector<1x16x256xf32>,
    %c0_25 = arith.constant 0 : index
    %c16 = arith.constant 16 : index
    %c0_26 = arith.constant 0 : index
    %48 = vector.load %arg7[%c0_25, %c16, %c0_26] : memref<1x32x256xf32, #tpu.memory_space<vmem>>, vector<1x16x256xf32>
    %49 = vector.shape_cast %48 : vector<1x16x256xf32> to vector<16x256xf32>
    %50 = vector.shape_cast %44 : vector<16x256xf32> to vector<1x16x256xf32>
    tpu.vector_store %arg7[%c0_25, %c16, %c0_26], %50 {strides = array<i32>} : memref<1x32x256xf32, #tpu.memory_space<vmem>>, vector<1x16x256xf32>,
    return
  }
  func.func @transform_0(%arg0: i32) -> (i32, i32, i32) {
    %c0_i32 = arith.constant 0 : i32
    %c0_i32_0 = arith.constant 0 : i32
    %c0_i32_1 = arith.constant 0 : i32
    return %arg0, %c0_i32, %c0_i32_0 : i32, i32, i32
  }
  func.func @transform_1(%arg0: i32) -> (i32, i32, i32) {
    %c0_i32 = arith.constant 0 : i32
    %c0_i32_0 = arith.constant 0 : i32
    %c0_i32_1 = arith.constant 0 : i32
    return %arg0, %c0_i32, %c0_i32_0 : i32, i32, i32
  }
  func.func @transform_2(%arg0: i32) -> (i32, i32) {
    %c0_i32 = arith.constant 0 : i32
    %c0_i32_0 = arith.constant 0 : i32
    %c0_i32_1 = arith.constant 0 : i32
    return %c0_i32, %c0_i32_0 : i32, i32
  }
  func.func @transform_3(%arg0: i32) -> (i32, i32) {
    %c0_i32 = arith.constant 0 : i32
    %c0_i32_0 = arith.constant 0 : i32
    %c0_i32_1 = arith.constant 0 : i32
    return %c0_i32, %c0_i32_0 : i32, i32
  }
  func.func @transform_4(%arg0: i32) -> (i32, i32) {
    %c0_i32 = arith.constant 0 : i32
    %c0_i32_0 = arith.constant 0 : i32
    %c0_i32_1 = arith.constant 0 : i32
    return %c0_i32, %c0_i32_0 : i32, i32
  }
  func.func @transform_5(%arg0: i32) -> (i32, i32) {
    %c0_i32 = arith.constant 0 : i32
    %c0_i32_0 = arith.constant 0 : i32
    %c0_i32_1 = arith.constant 0 : i32
    return %c0_i32, %c0_i32_0 : i32, i32
  }
  func.func @transform_6(%arg0: i32) -> (i32, i32, i32) {
    %c0_i32 = arith.constant 0 : i32
    %c0_i32_0 = arith.constant 0 : i32
    %c0_i32_1 = arith.constant 0 : i32
    return %arg0, %c0_i32, %c0_i32_0 : i32, i32, i32
  }
}

</mosaic_0001>

<llo_original>
// kernel: tpu_custom_call.1
$region0: #{tpu_custom_call.1}
  #allocation0 [shape = 'u32[]', space=smem, size = 0x4, offset = 0x4, fixed_abs, tag = 'smem constant byte address 0x4 - core index']
  #allocation1 [shape = 'u32[144,128]{1,0:T(1,128)}', space=vmem, size = 0x12000, scoped, tag = 'internal scratch']
  %s0 = inlined_call_operand.hbm [shape: f32[2,32,256], index: 0, kind: input, shape index: {}]
  %s1 = inlined_call_operand.hbm [shape: f32[2,16,256], index: 1, kind: input, shape index: {}]
  %s2 = inlined_call_operand.vmem [shape: f32[16,32], index: 2, kind: input, shape index: {}]
  %s3 = inlined_call_operand.vmem [shape: f32[16,1], index: 3, kind: input, shape index: {}]
  %s4 = inlined_call_operand.vmem [shape: f32[2,32], index: 4, kind: input, shape index: {}]
  %s5 = inlined_call_operand.vmem [shape: f32[32,2], index: 5, kind: input, shape index: {}]
  %s6 = inlined_call_operand.hbm [shape: f32[2,32,256], index: 6, kind: output, shape index: {}]
  %s7 = sld [smem:[#allocation0]]
  $region65: #{tpu_custom_call.1} parent=0
    _
  %s9 = ssub.s32 1, %s7
  %s10 = scalar_select 0, %s9, %s7
  $region1: #{tpu_custom_call.1} parent=0
    #allocation2 [shape = 'u8[65536]{0}', space=vmem, size = 0x10000, scoped, tag = 'input window, operand 0']
    #allocation3 [shape = 's32[2]{0}', space=sflag, size = 0x8, scoped, tag = 'scoped memory for tpu_custom_call.1']
    #allocation4 [shape = 's32[2]{0}', space=sflag, size = 0x8, scoped, tag = 'scoped memory for tpu_custom_call.1']
    #allocation5 [shape = 'u8[32768]{0}', space=vmem, size = 0x8000, scoped, tag = 'input window, operand 1']
    #allocation6 [shape = 's32[2]{0}', space=sflag, size = 0x8, scoped, tag = 'scoped memory for tpu_custom_call.1']
    #allocation7 [shape = 'u8[65536]{0}', space=vmem, size = 0x10000, scoped, tag = 'output window, operand 0']
    %11 = vsyncpa [#allocation3], 0
    %s12 = scalar_lea.sflag [#allocation3], 1
    %13 = vsyncpa %s12, 0
    %14 = vsyncpa [#allocation6], 0
    %s15 = scalar_lea.sflag [#allocation6], 1
    %16 = vsyncpa %s15, 0
    %17 = vsyncpa [#allocation4], 0
    %s18 = scalar_lea.sflag [#allocation4], 1
    %19 = vsyncpa %s18, 0
    loop: start=0, step=1, limit=4
    $region2: #{tpu_custom_call.1} parent=1 // loop_pre_header
      _
    $region3: #{tpu_custom_call.1} parent=1 // loop_header
      %s21 = sphi 0, %s25
      %p22 = scmp.ge.s32.totalorder %s21, 4
      %s31 = sphi 0, %s33
      %s34 = sphi 0, %s31
      %s35 = sphi 0, %s34
      %s51 = sphi 0, %s35
      %s57 = sphi 0, %s59
      %s60 = sphi 0, %s57
      %s61 = sphi 0, %s60
      %s77 = sphi 0, %s61
      %s81 = sphi 0, %s81
      %s83 = sphi 0, %s81
      %s84 = sphi 0, %s83
      %s98 = sphi 0, %s84
      %s102 = sphi 0, %s102
      %s104 = sphi 0, %s102
      %s105 = sphi 0, %s104
      %s119 = sphi 0, %s105
      %s123 = sphi 0, %s123
      %s125 = sphi 0, %s123
      %s126 = sphi 0, %s125
      %s140 = sphi 0, %s126
      %s144 = sphi 0, %s144
      %s146 = sphi 0, %s144
      %s147 = sphi 0, %s146
      %s161 = sphi 0, %s147
      %s167 = sphi 0, %s169
      %s170 = sphi 0, %s167
      %s171 = sphi 0, %s170
      %s187 = sphi 0, %s171
    $region4: #{tpu_custom_call.1} parent=1 // loop_header_branch
      %24 = sbr.rel (%p22) target = $region8
    $region5: #{tpu_custom_call.1} parent=1 // loop_body
      %s26 = ssub.s32 %s21, 1
      %s27 = ssub.s32 %s21, 2
      %s28 = sadd.s32 %s21, 1
      %s29 = ssub.s32 %s21, %s28
      %p30 = scmp.eq.s32.totalorder %s29, 0
      %s32 = sadd.s32 %s31, 1
      %s33 = scalar_select %p30, %s31, %s32
      %p36 = pneg %p30
      %p37 = scmp.eq.s32.totalorder %s21, 1
      %p38 = por %p36, %p37
      %p39 = scmp.ne.s32.totalorder %s31, %s34
      %p40 = scmp.eq.s32.totalorder %s21, 0
      %p41 = por %p39, %p40
      %p42 = scmp.ne.s32.totalorder %s31, %s34
      %p43 = scmp.eq.s32.totalorder %s26, 1
      %p44 = por %p42, %p43
      %p45 = scmp.ne.s32.totalorder %s34, %s35
      %p46 = scmp.eq.s32.totalorder %s26, 0
      %p47 = por %p45, %p46
      %p48 = scmp.ne.s32.totalorder %s34, %s35
      %p49 = scmp.eq.s32.totalorder %s27, 1
      %p50 = por %p48, %p49
      %p52 = scmp.ne.s32.totalorder %s35, %s51
      %p53 = scmp.eq.s32.totalorder %s27, 0
      %p54 = por %p52, %p53
      %s55 = ssub.s32 %s21, %s28
      %p56 = scmp.eq.s32.totalorder %s55, 0
      %s58 = sadd.s32 %s57, 1
      %s59 = scalar_select %p56, %s57, %s58
      %p62 = pneg %p56
      %p63 = scmp.eq.s32.totalorder %s21, 1
      %p64 = por %p62, %p63
      %p65 = scmp.ne.s32.totalorder %s57, %s60
      %p66 = scmp.eq.s32.totalorder %s21, 0
      %p67 = por %p65, %p66
      %p68 = scmp.ne.s32.totalorder %s57, %s60
      %p69 = scmp.eq.s32.totalorder %s26, 1
      %p70 = por %p68, %p69
      %p71 = scmp.ne.s32.totalorder %s60, %s61
      %p72 = scmp.eq.s32.totalorder %s26, 0
      %p73 = por %p71, %p72
      %p74 = scmp.ne.s32.totalorder %s60, %s61
      %p75 = scmp.eq.s32.totalorder %s27, 1
      %p76 = por %p74, %p75
      %p78 = scmp.ne.s32.totalorder %s61, %s77
      %p79 = scmp.eq.s32.totalorder %s27, 0
      %p80 = por %p78, %p79
      %s82 = sadd.s32 %s81, 1
      %p85 = scmp.eq.s32.totalorder %s21, 1
      %p86 = scmp.ne.s32.totalorder %s81, %s83
      %p87 = scmp.eq.s32.totalorder %s21, 0
      %p88 = por %p86, %p87
      %p89 = scmp.ne.s32.totalorder %s81, %s83
      %p90 = scmp.eq.s32.totalorder %s26, 1
      %p91 = por %p89, %p90
      %p92 = scmp.ne.s32.totalorder %s83, %s84
      %p93 = scmp.eq.s32.totalorder %s26, 0
      %p94 = por %p92, %p93
      %p95 = scmp.ne.s32.totalorder %s83, %s84
      %p96 = scmp.eq.s32.totalorder %s27, 1
      %p97 = por %p95, %p96
      %p99 = scmp.ne.s32.totalorder %s84, %s98
      %p100 = scmp.eq.s32.totalorder %s27, 0
      %p101 = por %p99, %p100
      %s103 = sadd.s32 %s102, 1
      %p106 = scmp.eq.s32.totalorder %s21, 1
      %p107 = scmp.ne.s32.totalorder %s102, %s104
      %p108 = scmp.eq.s32.totalorder %s21, 0
      %p109 = por %p107, %p108
      %p110 = scmp.ne.s32.totalorder %s102, %s104
      %p111 = scmp.eq.s32.totalorder %s26, 1
      %p112 = por %p110, %p111
      %p113 = scmp.ne.s32.totalorder %s104, %s105
      %p114 = scmp.eq.s32.totalorder %s26, 0
      %p115 = por %p113, %p114
      %p116 = scmp.ne.s32.totalorder %s104, %s105
      %p117 = scmp.eq.s32.totalorder %s27, 1
      %p118 = por %p116, %p117
      %p120 = scmp.ne.s32.totalorder %s105, %s119
      %p121 = scmp.eq.s32.totalorder %s27, 0
      %p122 = por %p120, %p121
      %s124 = sadd.s32 %s123, 1
      %p127 = scmp.eq.s32.totalorder %s21, 1
      %p128 = scmp.ne.s32.totalorder %s123, %s125
      %p129 = scmp.eq.s32.totalorder %s21, 0
      %p130 = por %p128, %p129
      %p131 = scmp.ne.s32.totalorder %s123, %s125
      %p132 = scmp.eq.s32.totalorder %s26, 1
      %p133 = por %p131, %p132
      %p134 = scmp.ne.s32.totalorder %s125, %s126
      %p135 = scmp.eq.s32.totalorder %s26, 0
      %p136 = por %p134, %p135
      %p137 = scmp.ne.s32.totalorder %s125, %s126
      %p138 = scmp.eq.s32.totalorder %s27, 1
      %p139 = por %p137, %p138
      %p141 = scmp.ne.s32.totalorder %s126, %s140
      %p142 = scmp.eq.s32.totalorder %s27, 0
      %p143 = por %p141, %p142
      %s145 = sadd.s32 %s144, 1
      %p148 = scmp.eq.s32.totalorder %s21, 1
      %p149 = scmp.ne.s32.totalorder %s144, %s146
      %p150 = scmp.eq.s32.totalorder %s21, 0
      %p151 = por %p149, %p150
      %p152 = scmp.ne.s32.totalorder %s144, %s146
      %p153 = scmp.eq.s32.totalorder %s26, 1
      %p154 = por %p152, %p153
      %p155 = scmp.ne.s32.totalorder %s146, %s147
      %p156 = scmp.eq.s32.totalorder %s26, 0
      %p157 = por %p155, %p156
      %p158 = scmp.ne.s32.totalorder %s146, %s147
      %p159 = scmp.eq.s32.totalorder %s27, 1
      %p160 = por %p158, %p159
      %p162 = scmp.ne.s32.totalorder %s147, %s161
      %p163 = scmp.eq.s32.totalorder %s27, 0
      %p164 = por %p162, %p163
      %s165 = ssub.s32 %s21, %s28
      %p166 = scmp.eq.s32.totalorder %s165, 0
      %s168 = sadd.s32 %s167, 1
      %s169 = scalar_select %p166, %s167, %s168
      %p172 = pneg %p166
      %p173 = scmp.eq.s32.totalorder %s21, 1
      %p174 = por %p172, %p173
      %p175 = scmp.ne.s32.totalorder %s167, %s170
      %p176 = scmp.eq.s32.totalorder %s21, 0
      %p177 = por %p175, %p176
      %p178 = scmp.ne.s32.totalorder %s167, %s170
      %p179 = scmp.eq.s32.totalorder %s26, 1
      %p180 = por %p178, %p179
      %p181 = scmp.ne.s32.totalorder %s170, %s171
      %p182 = scmp.eq.s32.totalorder %s26, 0
      %p183 = por %p181, %p182
      %p184 = scmp.ne.s32.totalorder %s170, %s171
      %p185 = scmp.eq.s32.totalorder %s27, 1
      %p186 = por %p184, %p185
      %p188 = scmp.ne.s32.totalorder %s171, %s187
      %p189 = scmp.eq.s32.totalorder %s27, 0
      %p190 = por %p188, %p189
      %p191 = scmp.le.s32.totalorder 1, %s21
      %p192 = scmp.lt.s32.totalorder %s21, 3
      %p193 = pnand %p191, %p192
      %p194 = pneg %p193
      // Predicated region
      $region9: #{tpu_custom_call.1} parent=5 // pred_check
        _
      $region10: #{tpu_custom_call.1} parent=5 // pred_check_branch
        %196 = sbr.rel (%p193) target = $region12
      $region11: #{tpu_custom_call.1} parent=5 // pred_region
        %s197 = ssub.s32 %s21, 1
        // Predicated region
        $region13: #{tpu_custom_call.1} parent=11 // pred_check
          %p198 = pneg %p94
        $region14: #{tpu_custom_call.1} parent=11 // pred_check_branch
          %200 = sbr.rel (%p198) target = $region16
        $region15: #{tpu_custom_call.1} parent=11 // pred_region
          _
        $region16: #{tpu_custom_call.1} parent=11 // pred_fallthru
          _
        // Predicated region
        $region17: #{tpu_custom_call.1} parent=11 // pred_check
          %p201 = pneg %p115
        $region18: #{tpu_custom_call.1} parent=11 // pred_check_branch
          %203 = sbr.rel (%p201) target = $region20
        $region19: #{tpu_custom_call.1} parent=11 // pred_region
          _
        $region20: #{tpu_custom_call.1} parent=11 // pred_fallthru
          _
        // Predicated region
        $region21: #{tpu_custom_call.1} parent=11 // pred_check
          %p204 = pneg %p136
        $region22: #{tpu_custom_call.1} parent=11 // pred_check_branch
          %206 = sbr.rel (%p204) target = $region24
        $region23: #{tpu_custom_call.1} parent=11 // pred_region
          _
        $region24: #{tpu_custom_call.1} parent=11 // pred_fallthru
          _
        // Predicated region
        $region25: #{tpu_custom_call.1} parent=11 // pred_check
          %p207 = pneg %p157
        $region26: #{tpu_custom_call.1} parent=11 // pred_check_branch
          %209 = sbr.rel (%p207) target = $region28
        $region27: #{tpu_custom_call.1} parent=11 // pred_region
          _
        $region28: #{tpu_custom_call.1} parent=11 // pred_fallthru
          _
      $region12: #{tpu_custom_call.1} parent=5 // pred_fallthru
        _
      %p210 = scmp.lt.s32.totalorder %s21, 2
      // Predicated region
      $region29: #{tpu_custom_call.1} parent=5 // pred_check
        %p211 = pneg %p210
      $region30: #{tpu_custom_call.1} parent=5 // pred_check_branch
        %213 = sbr.rel (%p211) target = $region32
      $region31: #{tpu_custom_call.1} parent=5 // pred_region
        // Predicated region
        $region33: #{tpu_custom_call.1} parent=31 // pred_check
          %p214 = pneg %p41
        $region34: #{tpu_custom_call.1} parent=31 // pred_check_branch
          %216 = sbr.rel (%p214) target = $region36
        $region35: #{tpu_custom_call.1} parent=31 // pred_region
          %s217 = sand.u32 %s31, 1
          %s218 = scalar_lea.sflag [#allocation3], %s217
          %s219 = sand.u32 %s31, 1
          %s220 = smul.addr %s219, 64
          %s221 = scalar_lea.vmem [#allocation2], %s220
          %s223 = ssub.s32 1024, 1024
          %224 = vsyncadd %s218, %s223
          %s225 = smul.addr %s21, 8
          %s226 = smul.addr %s225, 128
          %s227 = scalar_lea.hbm %s0, %s226
          %s228 = sshll.u32 %s221, 4
          %s229 = int_to_ptr.vmem [resolvable:$true] %s228
          %234 = dma.hbm_to_vmem [thread:$0]  %s227, 1024, %s229, %s218, 256, 256, 16
        $region36: #{tpu_custom_call.1} parent=31 // pred_fallthru
          _
        // Predicated region
        $region37: #{tpu_custom_call.1} parent=31 // pred_check
          %p235 = pneg %p67
        $region38: #{tpu_custom_call.1} parent=31 // pred_check_branch
          %237 = sbr.rel (%p235) target = $region40
        $region39: #{tpu_custom_call.1} parent=31 // pred_region
          %s238 = sand.u32 %s57, 1
          %s239 = scalar_lea.sflag [#allocation6], %s238
          %s240 = sand.u32 %s57, 1
          %s241 = smul.addr %s240, 32
          %s242 = scalar_lea.vmem [#allocation5], %s241
          %s244 = ssub.s32 512, 512
          %245 = vsyncadd %s239, %s244
          %s246 = smul.addr %s21, 4
          %s247 = smul.addr %s246, 128
          %s248 = scalar_lea.hbm %s1, %s247
          %s249 = sshll.u32 %s242, 4
          %s250 = int_to_ptr.vmem [resolvable:$true] %s249
          %255 = dma.hbm_to_vmem [thread:$0]  %s248, 512, %s250, %s239, 256, 256, 16
        $region40: #{tpu_custom_call.1} parent=31 // pred_fallthru
          _
      $region32: #{tpu_custom_call.1} parent=5 // pred_fallthru
        _
      %p256 = scmp.le.s32.totalorder 1, %s21
      %p257 = scmp.lt.s32.totalorder %s21, 3
      %p258 = pnand %p256, %p257
      %p259 = pneg %p258
      // Predicated region
      $region41: #{tpu_custom_call.1} parent=5 // pred_check
        _
      $region42: #{tpu_custom_call.1} parent=5 // pred_check_branch
        %261 = sbr.rel (%p258) target = $region44
      $region43: #{tpu_custom_call.1} parent=5 // pred_region
        %s262 = ssub.s32 %s21, 1
        %s263 = sand.u32 %s34, 1
        %s264 = scalar_lea.sflag [#allocation3], %s263
        %s265 = sand.u32 %s34, 1
        %s266 = smul.addr %s265, 64
        %s267 = scalar_lea.vmem [#allocation2], %s266
        // Predicated region
        $region45: #{tpu_custom_call.1} parent=43 // pred_check
          %p268 = pneg %p47
        $region46: #{tpu_custom_call.1} parent=43 // pred_check_branch
          %270 = sbr.rel (%p268) target = $region48
        $region47: #{tpu_custom_call.1} parent=43 // pred_region
          %271 = dma.done %s264, 1024
        $region48: #{tpu_custom_call.1} parent=43 // pred_fallthru
          _
        %s272 = sand.u32 %s60, 1
        %s273 = scalar_lea.sflag [#allocation6], %s272
        %s274 = sand.u32 %s60, 1
        %s275 = smul.addr %s274, 32
        %s276 = scalar_lea.vmem [#allocation5], %s275
        // Predicated region
        $region49: #{tpu_custom_call.1} parent=43 // pred_check
          %p277 = pneg %p73
        $region50: #{tpu_custom_call.1} parent=43 // pred_check_branch
          %279 = sbr.rel (%p277) target = $region52
        $region51: #{tpu_custom_call.1} parent=43 // pred_region
          %280 = dma.done %s273, 512
        $region52: #{tpu_custom_call.1} parent=43 // pred_fallthru
          _
        %s281 = sand.u32 %s34, 1
        %s282 = scalar_lea.sflag [#allocation3], %s281
        %s283 = sand.u32 %s34, 1
        %s284 = smul.addr %s283, 64
        %s285 = scalar_lea.vmem [#allocation2], %s284
        %p286 = pneg %p47
        %p287 = pneg %p44
        %s288 = sand.u32 %s60, 1
        %s289 = scalar_lea.sflag [#allocation6], %s288
        %s290 = sand.u32 %s60, 1
        %s291 = smul.addr %s290, 32
        %s292 = scalar_lea.vmem [#allocation5], %s291
        %p293 = pneg %p73
        %p294 = pneg %p70
        %p295 = pneg %p94
        %p296 = pneg %p91
        %p297 = pneg %p115
        %p298 = pneg %p112
        %p299 = pneg %p136
        %p300 = pneg %p133
        %p301 = pneg %p157
        %p302 = pneg %p154
        %p303 = pneg %p183
        %p304 = pneg %p180
        %s305 = sand.u32 %s170, 1
        %s306 = scalar_lea.sflag [#allocation4], %s305
        %s307 = sand.u32 %s170, 1
        %s308 = smul.addr %s307, 64
        %s309 = scalar_lea.vmem [#allocation7], %s308
        %v310 = vld [vmem:[%s267] sm:$0xff]
        %v311 = vld [vmem:[%s267 + $0x8] sm:$0xff]
        %v312 = vld [vmem:[%s267 + $0x10] sm:$0xff]
        %v313 = vld [vmem:[%s267 + $0x18] sm:$0xff]
        %v314 = vld [vmem:[%s267 + $0x20] sm:$0xff]
        %v315 = vld [vmem:[%s267 + $0x28] sm:$0xff]
        %v316 = vld [vmem:[%s267 + $0x30] sm:$0xff]
        %v317 = vld [vmem:[%s267 + $0x38] sm:$0xff]
        %v318 = vld [vmem:[%s276] sm:$0xff]
        %v319 = vld [vmem:[%s276 + $0x8] sm:$0xff]
        %v320 = vld [vmem:[%s276 + $0x10] sm:$0xff]
        %v321 = vld [vmem:[%s276 + $0x18] sm:$0xff]
        %v322 = vld [vmem:[%s2] sm:$0xff]
        %v323 = vld [vmem:[%s2 + $0x8] sm:$0xff]
        %v324 = vld [vmem:[%s3] sm:$0xff]
        %v325 = vld [vmem:[%s3 + $0x8] sm:$0xff]
        %327 = vset.pattern.permute.xlu0 0
        %328 = vperm.xlu0 %327, %v324
        %v329 = vpop.permute.xlu0 %328
        %332 = vset.pattern.permute.xlu0 0
        %333 = vperm.xlu0 %332, %v325
        %v334 = vpop.permute.xlu0 %333
        %vm336 = vcmask 261120
        %v338 = vsel %vm336, %v322, 0
        %v341 = vsel %vm336, %v323, 0
        %343 = vmatprep.subr.mxu0 0.0
        %344 = vmatpush1.msra.mxu0 0.0
        %345 = vmatprep.subr.mxu0 0.0
        %346 = vmatpush1.msra.mxu0 0.0
        %347 = vmatprep.subr.mxu0 0.0
        %348 = vmatpush1.msra.mxu0 0.0
        %349 = vmatprep.subr.mxu0 0.0
        %350 = vmatpush1.msra.mxu0 0.0
        %351 = vmatprep.subr.mxu0 0.0
        %352 = vmatpush1.msra.mxu0 0.0
        %353 = vmatprep.subr.mxu0 0.0
        %354 = vmatpush1.msra.mxu0 0.0
        %355 = vmatprep.subr.mxu0 0.0
        %356 = vmatpush1.msra.mxu0 0.0
        %357 = vmatprep.subr.mxu0 0.0
        %358 = vmatpush1.msra.mxu0 0.0
        %359 = vmatprep.subr.mxu0 0.0
        %360 = vmatpush1.msra.mxu0 0.0
        %361 = vmatprep.subr.mxu0 0.0
        %362 = vmatpush1.msra.mxu0 0.0
        %363 = vmatprep.subr.mxu0 0.0
        %364 = vmatpush1.msra.mxu0 0.0
        %365 = vmatprep.subr.mxu0 0.0
        %366 = vmatpush1.msra.mxu0 0.0
        %367 = vmatprep.subr.mxu0 %v317
        %368 = vmatpush1.msra.mxu0 %v316
        %369 = vmatprep.subr.mxu0 %v315
        %370 = vmatpush1.msra.mxu0 %v314
        %371 = vmatprep.subr.mxu0 %v313
        %372 = vmatpush1.msra.mxu0 %v312
        %373 = vmatprep.subr.mxu0 %v311
        %374 = vmatpush1.msra.mxu0 %v310
        %375 = vmatprep.subr.mxu0 0.0
        %376 = vmatpush2.msra.mxu0 0.0
        %377 = vmatprep.subr.mxu0 0.0
        %378 = vmatpush2.msra.mxu0 0.0
        %379 = vmatprep.subr.mxu0 0.0
        %380 = vmatpush2.msra.mxu0 0.0
        %381 = vmatprep.subr.mxu0 0.0
        %382 = vmatpush2.msra.mxu0 0.0
        %383 = vmatprep.subr.mxu0 0.0
        %384 = vmatpush2.msra.mxu0 0.0
        %385 = vmatprep.subr.mxu0 0.0
        %386 = vmatpush2.msra.mxu0 0.0
        %387 = vmatprep.subr.mxu0 0.0
        %388 = vmatpush2.msra.mxu0 0.0
        %389 = vmatprep.subr.mxu0 0.0
        %390 = vmatpush2.msra.mxu0 0.0
        %391 = vmatprep.subr.mxu0 0.0
        %392 = vmatpush2.msra.mxu0 0.0
        %393 = vmatprep.subr.mxu0 0.0
        %394 = vmatpush2.msra.mxu0 0.0
        %395 = vmatprep.subr.mxu0 0.0
        %396 = vmatpush2.msra.mxu0 0.0
        %397 = vmatprep.subr.mxu0 0.0
        %398 = vmatpush2.msra.mxu0 0.0
        %399 = vmatprep.subr.mxu0 0.0
        %400 = vmatpush2.msra.mxu0 0.0
        %401 = vmatprep.subr.mxu0 0.0
        %402 = vmatpush2.msra.mxu0 0.0
        %403 = vmatprep.subr.mxu0 0.0
        %404 = vmatpush2.msra.mxu0 0.0
        %405 = vmatprep.subr.mxu0 0.0
        %406 = vmatpush2.msra.mxu0 0.0
        %407 = vmatprep.mubr.f32.mxu0 0.0
        %408 = vmatmul.mubr.f32.gmra.mxu0 %v338
        %v409 = vpop.f32.mrf.mxu0
        %v410 = vadd.f32 %v329, %v409
        %v411 = vpop.f32.mrf.mxu0
        %v412 = vadd.f32 %v329, %v411
        %413 = vmatprep.mubr.f32.mxu0 0.0
        %414 = vmatmul.mubr.f32.gmra.mxu0 %v341
        %v415 = vpop.f32.mrf.mxu0
        %v416 = vadd.f32 %v334, %v415
        %v417 = vpop.f32.mrf.mxu0
        %v418 = vadd.f32 %v334, %v417
        %419 = vdwg.mxu0
        %v420 = vxor.u32 %v410, 2147483648
        %v421 = vxor.u32 %v412, 2147483648
        %v422 = vxor.u32 %v416, 2147483648
        %v423 = vxor.u32 %v418, 2147483648
        %v424 = vmul.f32 %v420, 1.442695
        %v425 = vpow.pop %v424
        %v426 = vmul.f32 %v421, 1.442695
        %v427 = vpow.pop %v426
        %v428 = vmul.f32 %v422, 1.442695
        %v429 = vpow.pop %v428
        %v430 = vmul.f32 %v423, 1.442695
        %v431 = vpow.pop %v430
        %v432 = vadd.f32 %v425, 1.0
        %v433 = vadd.f32 %v427, 1.0
        %v434 = vadd.f32 %v429, 1.0
        %v435 = vadd.f32 %v431, 1.0
        %v436 = vrcp.pop %v432
        %v437 = vmul.f32 1.0, %v436
        %v438 = vrcp.pop %v433
        %v439 = vmul.f32 1.0, %v438
        %v440 = vrcp.pop %v434
        %v441 = vmul.f32 1.0, %v440
        %v442 = vrcp.pop %v435
        %v443 = vmul.f32 1.0, %v442
        %v444 = vmul.f32 %v410, %v437
        %v445 = vmul.f32 %v412, %v439
        %v446 = vmul.f32 %v416, %v441
        %v447 = vmul.f32 %v418, %v443
        %v448 = vadd.f32 %v444, %v445
        %449 = vadd.xlane.f32.xlu0 %v448
        %v450 = vpop.xlane.xlu0 %449
        %v451 = vadd.f32 %v446, %v447
        %452 = vadd.xlane.f32.xlu0 %v451
        %v453 = vpop.xlane.xlu0 %452
        %v454 = vmul.f32 %v450, 0.00390625
        %v455 = vmul.f32 %v453, 0.00390625
        %v456 = vadd.f32 %v318, %v319
        %457 = vadd.xlane.f32.xlu0 %v456
        %v458 = vpop.xlane.xlu0 %457
        %v459 = vadd.f32 %v320, %v321
        %460 = vadd.xlane.f32.xlu0 %v459
        %v461 = vpop.xlane.xlu0 %460
        %v462 = vmul.f32 %v458, 0.00390625
        %v463 = vmul.f32 %v461, 0.00390625
        %v464 = vld [vmem:[%s4] sm:$0x3]
        %v466 = vsel %vm336, %v464, 0
        %468 = vmatprep.subr.mxu0 0.0
        %469 = vmatpush1.msra.mxu0 0.0
        %470 = vmatprep.subr.mxu0 0.0
        %471 = vmatpush1.msra.mxu0 0.0
        %472 = vmatprep.subr.mxu0 0.0
        %473 = vmatpush1.msra.mxu0 0.0
        %474 = vmatprep.subr.mxu0 0.0
        %475 = vmatpush1.msra.mxu0 0.0
        %476 = vmatprep.subr.mxu0 0.0
        %477 = vmatpush1.msra.mxu0 0.0
        %478 = vmatprep.subr.mxu0 0.0
        %479 = vmatpush1.msra.mxu0 0.0
        %480 = vmatprep.subr.mxu0 0.0
        %481 = vmatpush1.msra.mxu0 0.0
        %482 = vmatprep.subr.mxu0 0.0
        %483 = vmatpush1.msra.mxu0 0.0
        %484 = vmatprep.subr.mxu0 0.0
        %485 = vmatpush1.msra.mxu0 0.0
        %486 = vmatprep.subr.mxu0 0.0
        %487 = vmatpush1.msra.mxu0 0.0
        %488 = vmatprep.subr.mxu0 0.0
        %489 = vmatpush1.msra.mxu0 0.0
        %490 = vmatprep.subr.mxu0 0.0
        %491 = vmatpush1.msra.mxu0 0.0
        %492 = vmatprep.subr.mxu0 0.0
        %493 = vmatpush1.msra.mxu0 %v463
        %494 = vmatprep.subr.mxu0 0.0
        %495 = vmatpush1.msra.mxu0 %v462
        %496 = vmatprep.subr.mxu0 0.0
        %497 = vmatpush1.msra.mxu0 %v455
        %498 = vmatprep.subr.mxu0 0.0
        %499 = vmatpush1.msra.mxu0 %v454
        %500 = vmatprep.subr.mxu0 0.0
        %501 = vmatpush2.msra.mxu0 0.0
        %502 = vmatprep.subr.mxu0 0.0
        %503 = vmatpush2.msra.mxu0 0.0
        %504 = vmatprep.subr.mxu0 0.0
        %505 = vmatpush2.msra.mxu0 0.0
        %506 = vmatprep.subr.mxu0 0.0
        %507 = vmatpush2.msra.mxu0 0.0
        %508 = vmatprep.subr.mxu0 0.0
        %509 = vmatpush2.msra.mxu0 0.0
        %510 = vmatprep.subr.mxu0 0.0
        %511 = vmatpush2.msra.mxu0 0.0
        %512 = vmatprep.subr.mxu0 0.0
        %513 = vmatpush2.msra.mxu0 0.0
        %514 = vmatprep.subr.mxu0 0.0
        %515 = vmatpush2.msra.mxu0 0.0
        %516 = vmatprep.subr.mxu0 0.0
        %517 = vmatpush2.msra.mxu0 0.0
        %518 = vmatprep.subr.mxu0 0.0
        %519 = vmatpush2.msra.mxu0 0.0
        %520 = vmatprep.subr.mxu0 0.0
        %521 = vmatpush2.msra.mxu0 0.0
        %522 = vmatprep.subr.mxu0 0.0
        %523 = vmatpush2.msra.mxu0 0.0
        %524 = vmatprep.subr.mxu0 0.0
        %525 = vmatpush2.msra.mxu0 0.0
        %526 = vmatprep.subr.mxu0 0.0
        %527 = vmatpush2.msra.mxu0 0.0
        %528 = vmatprep.subr.mxu0 0.0
        %529 = vmatpush2.msra.mxu0 0.0
        %530 = vmatprep.subr.mxu0 0.0
        %531 = vmatpush2.msra.mxu0 0.0
        %532 = vmatprep.mubr.f32.mxu0 0.0
        %533 = vmatmul.mubr.f32.gmra.mxu0 %v466
        %v534 = vpop.f32.mrf.mxu0
        %v535 = vadd.f32 0.0, %v534
        %v536 = vpop.f32.mrf.mxu0
        %537 = vdwg.mxu0
        %v538 = vmax.f32 %v535, 0.0
        %v539 = vld [vmem:[%s5] sm:$0xff]
        %v540 = vld [vmem:[%s5 + $0x8] sm:$0xff]
        %v541 = vld [vmem:[%s5 + $0x10] sm:$0xff]
        %v542 = vld [vmem:[%s5 + $0x18] sm:$0xff]
        %vm543 = vcmask 15360
        %v545 = vsel %vm543, %v539, 0
        %v548 = vsel %vm543, %v540, 0
        %v551 = vsel %vm543, %v541, 0
        %v554 = vsel %vm543, %v542, 0
        %vm556 = vcmask 1041408
        %v558 = vsel %vm556, %v538, 0
        %560 = vmatprep.subr.mxu0 0.0
        %561 = vmatpush1.msra.mxu0 0.0
        %562 = vmatprep.subr.mxu0 0.0
        %563 = vmatpush1.msra.mxu0 0.0
        %564 = vmatprep.subr.mxu0 0.0
        %565 = vmatpush1.msra.mxu0 0.0
        %566 = vmatprep.subr.mxu0 0.0
        %567 = vmatpush1.msra.mxu0 0.0
        %568 = vmatprep.subr.mxu0 0.0
        %569 = vmatpush1.msra.mxu0 0.0
        %570 = vmatprep.subr.mxu0 0.0
        %571 = vmatpush1.msra.mxu0 0.0
        %572 = vmatprep.subr.mxu0 0.0
        %573 = vmatpush1.msra.mxu0 0.0
        %574 = vmatprep.subr.mxu0 0.0
        %575 = vmatpush1.msra.mxu0 0.0
        %576 = vmatprep.subr.mxu0 0.0
        %577 = vmatpush1.msra.mxu0 0.0
        %578 = vmatprep.subr.mxu0 0.0
        %579 = vmatpush1.msra.mxu0 0.0
        %580 = vmatprep.subr.mxu0 0.0
        %581 = vmatpush1.msra.mxu0 0.0
        %582 = vmatprep.subr.mxu0 0.0
        %583 = vmatpush1.msra.mxu0 0.0
        %584 = vmatprep.subr.mxu0 0.0
        %585 = vmatpush1.msra.mxu0 0.0
        %586 = vmatprep.subr.mxu0 0.0
        %587 = vmatpush1.msra.mxu0 0.0
        %588 = vmatprep.subr.mxu0 0.0
        %589 = vmatpush1.msra.mxu0 0.0
        %590 = vmatprep.subr.mxu0 0.0
        %591 = vmatpush1.msra.mxu0 %v558
        %592 = vmatprep.subr.mxu0 0.0
        %593 = vmatpush2.msra.mxu0 0.0
        %594 = vmatprep.subr.mxu0 0.0
        %595 = vmatpush2.msra.mxu0 0.0
        %596 = vmatprep.subr.mxu0 0.0
        %597 = vmatpush2.msra.mxu0 0.0
        %598 = vmatprep.subr.mxu0 0.0
        %599 = vmatpush2.msra.mxu0 0.0
        %600 = vmatprep.subr.mxu0 0.0
        %601 = vmatpush2.msra.mxu0 0.0
        %602 = vmatprep.subr.mxu0 0.0
        %603 = vmatpush2.msra.mxu0 0.0
        %604 = vmatprep.subr.mxu0 0.0
        %605 = vmatpush2.msra.mxu0 0.0
        %606 = vmatprep.subr.mxu0 0.0
        %607 = vmatpush2.msra.mxu0 0.0
        %608 = vmatprep.subr.mxu0 0.0
        %609 = vmatpush2.msra.mxu0 0.0
        %610 = vmatprep.subr.mxu0 0.0
        %611 = vmatpush2.msra.mxu0 0.0
        %612 = vmatprep.subr.mxu0 0.0
        %613 = vmatpush2.msra.mxu0 0.0
        %614 = vmatprep.subr.mxu0 0.0
        %615 = vmatpush2.msra.mxu0 0.0
        %616 = vmatprep.subr.mxu0 0.0
        %617 = vmatpush2.msra.mxu0 0.0
        %618 = vmatprep.subr.mxu0 0.0
        %619 = vmatpush2.msra.mxu0 0.0
        %620 = vmatprep.subr.mxu0 0.0
        %621 = vmatpush2.msra.mxu0 0.0
        %622 = vmatprep.subr.mxu0 0.0
        %623 = vmatpush2.msra.mxu0 0.0
        %624 = vmatprep.mubr.f32.mxu0 0.0
        %625 = vmatmul.mubr.f32.gmra.mxu0 %v545
        %v626 = vpop.f32.mrf.mxu0
        %v627 = vadd.f32 0.0, %v626
        %v628 = vpop.f32.mrf.mxu0
        %629 = vmatprep.mubr.f32.mxu0 0.0
        %630 = vmatmul.mubr.f32.gmra.mxu0 %v548
        %v631 = vpop.f32.mrf.mxu0
        %v632 = vadd.f32 0.0, %v631
        %v633 = vpop.f32.mrf.mxu0
        %634 = vmatprep.mubr.f32.mxu0 0.0
        %635 = vmatmul.mubr.f32.gmra.mxu0 %v551
        %v636 = vpop.f32.mrf.mxu0
        %v637 = vadd.f32 0.0, %v636
        %v638 = vpop.f32.mrf.mxu0
        %639 = vmatprep.mubr.f32.mxu0 0.0
        %640 = vmatmul.mubr.f32.gmra.mxu0 %v554
        %v641 = vpop.f32.mrf.mxu0
        %v642 = vadd.f32 0.0, %v641
        %v643 = vpop.f32.mrf.mxu0
        %644 = vdwg.mxu0
        %v645 = vxor.u32 %v627, 2147483648
        %v646 = vxor.u32 %v632, 2147483648
        %v647 = vxor.u32 %v637, 2147483648
        %v648 = vxor.u32 %v642, 2147483648
        %v649 = vmul.f32 %v645, 1.442695
        %v650 = vpow.pop %v649
        %v651 = vmul.f32 %v646, 1.442695
        %v652 = vpow.pop %v651
        %v653 = vmul.f32 %v647, 1.442695
        %v654 = vpow.pop %v653
        %v655 = vmul.f32 %v648, 1.442695
        %v656 = vpow.pop %v655
        %v657 = vadd.f32 %v650, 1.0
        %v658 = vadd.f32 %v652, 1.0
        %v659 = vadd.f32 %v654, 1.0
        %v660 = vadd.f32 %v656, 1.0
        %v661 = vrcp.pop %v657
        %v662 = vmul.f32 1.0, %v661
        %v663 = vrcp.pop %v658
        %v664 = vmul.f32 1.0, %v663
        %v665 = vrcp.pop %v659
        %v666 = vmul.f32 1.0, %v665
        %v667 = vrcp.pop %v660
        %v668 = vmul.f32 1.0, %v667
        %v669 = vmul.f32 %v318, %v318
        %v670 = vmul.f32 %v319, %v319
        %v671 = vmul.f32 %v320, %v320
        %v672 = vmul.f32 %v321, %v321
        %674 = vset.pattern.permute.xlu0 0
        %675 = vperm.xlu0 %674, %v666
        %v676 = vpop.permute.xlu0 %675
        %679 = vset.pattern.permute.xlu0 0
        %680 = vperm.xlu0 %679, %v668
        %v681 = vpop.permute.xlu0 %680
        %v683 = vmul.f32 %v669, %v676
        %v684 = vmul.f32 %v670, %v676
        %v685 = vmul.f32 %v671, %v681
        %v686 = vmul.f32 %v672, %v681
        %v687 = vadd.f32 %v444, %v683
        %v688 = vadd.f32 %v445, %v684
        %v689 = vadd.f32 %v446, %v685
        %v690 = vadd.f32 %v447, %v686
        %v691 = vmul.f32 %v444, %v444
        %v692 = vmul.f32 %v445, %v445
        %v693 = vmul.f32 %v446, %v446
        %v694 = vmul.f32 %v447, %v447
        %696 = vset.pattern.permute.xlu0 0
        %697 = vperm.xlu0 %696, %v662
        %v698 = vpop.permute.xlu0 %697
        %701 = vset.pattern.permute.xlu0 0
        %702 = vperm.xlu0 %701, %v664
        %v703 = vpop.permute.xlu0 %702
        %v705 = vmul.f32 %v691, %v698
        %v706 = vmul.f32 %v692, %v698
        %v707 = vmul.f32 %v693, %v703
        %v708 = vmul.f32 %v694, %v703
        %v709 = vadd.f32 %v318, %v705
        %v710 = vadd.f32 %v319, %v706
        %v711 = vadd.f32 %v320, %v707
        %v712 = vadd.f32 %v321, %v708
        %713 = vst [vmem:[%s309] sm:$0xff] %v687
        %714 = vst [vmem:[%s309 + $0x8] sm:$0xff] %v688
        %715 = vst [vmem:[%s309 + $0x10] sm:$0xff] %v689
        %716 = vst [vmem:[%s309 + $0x18] sm:$0xff] %v690
        %717 = vst [vmem:[%s309 + $0x20] sm:$0xff] %v709
        %718 = vst [vmem:[%s309 + $0x28] sm:$0xff] %v710
        %719 = vst [vmem:[%s309 + $0x30] sm:$0xff] %v711
        %720 = vst [vmem:[%s309 + $0x38] sm:$0xff] %v712
        %s721 = sand.u32 %s170, 1
        %s722 = scalar_lea.sflag [#allocation4], %s721
        %s723 = sand.u32 %s170, 1
        %s724 = smul.addr %s723, 64
        %s725 = scalar_lea.vmem [#allocation7], %s724
        // Predicated region
        $region53: #{tpu_custom_call.1} parent=43 // pred_check
          %p726 = pneg %p180
        $region54: #{tpu_custom_call.1} parent=43 // pred_check_branch
          %728 = sbr.rel (%p726) target = $region56
        $region55: #{tpu_custom_call.1} parent=43 // pred_region
          %s730 = ssub.s32 1024, 1024
          %731 = vsyncadd %s722, %s730
          %s732 = smul.addr %s26, 8
          %s733 = smul.addr %s732, 128
          %s734 = scalar_lea.hbm %s6, %s733
          %s735 = sshll.u32 %s725, 4
          %s736 = int_to_ptr.vmem [resolvable:$true] %s735
          %741 = dma.vmem_to_hbm [thread:$0]  %s736, 1024, %s734, %s722, 256, 256, 16
        $region56: #{tpu_custom_call.1} parent=43 // pred_fallthru
          _
      $region44: #{tpu_custom_call.1} parent=5 // pred_fallthru
        _
      %p742 = scmp.le.s32.totalorder 2, %s21
      // Predicated region
      $region57: #{tpu_custom_call.1} parent=5 // pred_check
        %p743 = pneg %p742
      $region58: #{tpu_custom_call.1} parent=5 // pred_check_branch
        %745 = sbr.rel (%p743) target = $region60
      $region59: #{tpu_custom_call.1} parent=5 // pred_region
        %s746 = ssub.s32 %s21, 2
        // Predicated region
        $region61: #{tpu_custom_call.1} parent=59 // pred_check
          %p747 = pneg %p186
        $region62: #{tpu_custom_call.1} parent=59 // pred_check_branch
          %749 = sbr.rel (%p747) target = $region64
        $region63: #{tpu_custom_call.1} parent=59 // pred_region
          %s750 = sand.u32 %s171, 1
          %s751 = scalar_lea.sflag [#allocation4], %s750
          %s752 = sand.u32 %s171, 1
          %s753 = smul.addr %s752, 64
          %s754 = scalar_lea.vmem [#allocation7], %s753
          %755 = dma.done %s751, 1024
        $region64: #{tpu_custom_call.1} parent=59 // pred_fallthru
          _
      $region60: #{tpu_custom_call.1} parent=5 // pred_fallthru
        _
    $region6: #{tpu_custom_call.1} parent=1 // loop_footer
      %s25 = sadd.s32 1, %s21
    $region7: #{tpu_custom_call.1} parent=1 // loop_footer_branch
      %20 = sbr.rel target = $region3
    $region8: #{tpu_custom_call.1} parent=1 // loop_exit
      _
    %756 = vsyncpa [#allocation3], 1
    %s757 = scalar_lea.sflag [#allocation3], 1
    %758 = vsyncpa %s757, 1
    %759 = vsyncpa [#allocation6], 1
    %s760 = scalar_lea.sflag [#allocation6], 1
    %761 = vsyncpa %s760, 1
    %762 = vsyncpa [#allocation4], 1
    %s763 = scalar_lea.sflag [#allocation4], 1
    %764 = vsyncpa %s763, 1

</llo_original>
